<compile_context>
chip_gen: v5e
topology: v5e:2x2
jax: 0.10.0
libtpu: 0.0.40
codegen_flags: <defaults>
</compile_context>

<pallas_src>
import functools

import jax
import jax.numpy as jnp
from jax import lax
from jax.experimental import pallas as pl
from jax.experimental.pallas import tpu as pltpu

BN_EPS = 1e-5
_LANE_BUDGET = 32768                      # output spatial elements per grid step (per image group)
_VMEM_LIMIT = 48 * 1024 * 1024            # < v7x 64 MiB physical, > v5e 16 MiB default scoped


# --------------------------------------------------------------------------- planning helpers

def _plan_flat(N, S, lane_budget=_LANE_BUDGET):
    """Image-group size, spatial tile, #tiles, #groups for the lane-flat (patches) path."""
    cap = max(1, lane_budget // max(S, 1))
    Bn = 1
    for d in range(min(N, cap), 0, -1):
        if N % d == 0:
            Bn = d
            break
    Mt = min(S, lane_budget)
    T = pl.cdiv(S, Mt)
    return Bn, Mt, T, N // Bn


def _plan_fused(N, Ho, Wo, lane_budget=_LANE_BUDGET):
    """Row-tile plan for the fused-extraction path; None if the shape is not eligible."""
    if Wo % 128 != 0:
        return None
    max_th = max(1, lane_budget // Wo)
    if Ho <= max_th:
        th = Ho
    else:
        th = None
        start = (min(Ho, max_th) // 8) * 8
        for cand in range(start, 0, -8):
            if Ho % cand == 0:
                th = cand
                break
        if th is None:
            return None
    per = th * Wo
    cap = max(1, lane_budget // per)
    Bn = 1
    for d in range(min(N, cap), 0, -1):
        if N % d == 0:
            Bn = d
            break
    return Bn, th, Ho // th, N // Bn


# --------------------------------------------------------------------------- kernels (flat / patches path)

def _stats_kernel_flat(alpha_ref, p_ref, w_ref, b_ref, o_ref, mean_ref, m2_ref, *, S, Mt, Bn):
    # alpha_ref: SMEM (1,)       PReLU slope
    # p_ref:     (Bn, 12, Mt)    patch tile, rows (kh, kw, cin), lanes = spatial
    # w_ref:     (13, 12)        conv weight
    # b_ref:     (13, 1)         conv bias
    # o_ref:     (1, 13, 2)      per-group [mean, M2] (written once, at the last spatial tile)
    # mean_ref/m2_ref: VMEM scratch (13,1) running Chan statistics
    m = pl.program_id(1)
    T = pl.num_programs(1)

    @pl.when(m == 0)
    def _():
        mean_ref[...] = jnp.zeros_like(mean_ref)
        m2_ref[...] = jnp.zeros_like(m2_ref)

    col0 = m * Mt
    lane = col0 + lax.broadcasted_iota(jnp.int32, (1, Mt), 1)
    lmask = lane < S                                    # mask for a possibly-partial last tile
    n_b = jnp.minimum(S - col0, Mt).astype(jnp.float32)

    alpha = alpha_ref[0]
    w = w_ref[...]
    b = b_ref[...]
    for bi in range(Bn):
        p = p_ref[bi]                                                      # (12, Mt)
        conv = jnp.dot(w, p, preferred_element_type=jnp.float32) + b
        act = jnp.where(conv >= 0, conv, alpha * conv)                     # (13, Mt)
        s1 = jnp.sum(jnp.where(lmask, act, 0.0), axis=1, keepdims=True)    # (13, 1)
        mu_t = s1 / n_b
        d = jnp.where(lmask, act - mu_t, 0.0)
        m2_t = jnp.sum(d * d, axis=1, keepdims=True)
        # Chan merge of this (image, tile) chunk into the running statistics.
        n_a = m.astype(jnp.float32) * (Mt * Bn) + bi * n_b
        tot = n_a + n_b
        delta = mu_t - mean_ref[...]
        mean_ref[...] = mean_ref[...] + delta * (n_b / tot)
        m2_ref[...] = m2_ref[...] + m2_t + (delta * delta) * (n_a * n_b / tot)

    @pl.when(m == T - 1)
    def _():
        o_ref[0] = jnp.concatenate([mean_ref[...], m2_ref[...]], axis=1)


def _apply_kernel_flat(alpha_ref, p_ref, w_ref, aux_ref, o_ref, *, Bn):
    # aux_ref: (13, 3) columns [conv bias, folded BN scale, folded BN shift]
    # o_ref:   (Bn, 16, Mt) rows 0..12 conv branch, rows 13..15 maxpool branch
    alpha = alpha_ref[0]
    w = w_ref[...]
    aux = aux_ref[...]
    bias, scale, shift = aux[:, 0:1], aux[:, 1:2], aux[:, 2:3]
    for bi in range(Bn):
        p = p_ref[bi]                                                      # (12, Mt)
        conv = jnp.dot(w, p, preferred_element_type=jnp.float32) + bias
        act = jnp.where(conv >= 0, conv, alpha * conv)
        bn = act * scale + shift
        pool = jnp.maximum(jnp.maximum(p[0:3], p[3:6]),
                           jnp.maximum(p[6:9], p[9:12]))                   # (3, Mt)
        o_ref[bi] = jnp.concatenate([bn, pool], axis=0)                    # one full (16, Mt) store


# --------------------------------------------------------------------------- kernels (fused extraction path)

def _extract_patches(v, W):
    """v: (Bn, 3, th, 2W) where lanes are [row 2oh | row 2oh+1] -> (Bn, 12, th, Wo),
    patch rows ordered (kh, kw, cin) to match the folded conv weight."""
    r0 = v[..., :W]          # input rows 2*oh   (kh = 0)
    r1 = v[..., W:]          # input rows 2*oh+1 (kh = 1)
    return jnp.concatenate(
        [r0[..., 0::2], r0[..., 1::2], r1[..., 0::2], r1[..., 1::2]], axis=1)


def _stats_kernel_fused(alpha_ref, x_ref, w_ref, b_ref, o_ref, mean_ref, m2_ref, *, W, Wo, Bn):
    mh = pl.program_id(1)
    Th = pl.num_programs(1)

    @pl.when(mh == 0)
    def _():
        mean_ref[...] = jnp.zeros_like(mean_ref)
        m2_ref[...] = jnp.zeros_like(m2_ref)

    p = _extract_patches(x_ref[...], W)                 # (Bn, 12, th, Wo), exact tiles -> no mask
    th = p.shape[2]
    L = th * Wo
    n_b = float(L)
    alpha = alpha_ref[0]
    w = w_ref[...]
    b = b_ref[...]
    for bi in range(Bn):
        pm = p[bi].reshape(12, L)
        conv = jnp.dot(w, pm, preferred_element_type=jnp.float32) + b
        act = jnp.where(conv >= 0, conv, alpha * conv)
        s1 = jnp.sum(act, axis=1, keepdims=True)
        mu_t = s1 / n_b
        d = act - mu_t
        m2_t = jnp.sum(d * d, axis=1, keepdims=True)
        n_a = (mh.astype(jnp.float32) * Bn + bi) * n_b
        tot = n_a + n_b
        delta = mu_t - mean_ref[...]
        mean_ref[...] = mean_ref[...] + delta * (n_b / tot)
        m2_ref[...] = m2_ref[...] + m2_t + (delta * delta) * (n_a * n_b / tot)

    @pl.when(mh == Th - 1)
    def _():
        o_ref[0] = jnp.concatenate([mean_ref[...], m2_ref[...]], axis=1)


def _apply_kernel_fused(alpha_ref, x_ref, w_ref, aux_ref, o_ref, *, W, Wo, Bn):
    p = _extract_patches(x_ref[...], W)                 # (Bn, 12, th, Wo)
    th = p.shape[2]
    L = th * Wo
    alpha = alpha_ref[0]
    w = w_ref[...]
    aux = aux_ref[...]
    bias, scale, shift = aux[:, 0:1], aux[:, 1:2], aux[:, 2:3]
    for bi in range(Bn):
        pm = p[bi].reshape(12, L)
        conv = jnp.dot(w, pm, preferred_element_type=jnp.float32) + bias
        act = jnp.where(conv >= 0, conv, alpha * conv)
        bn = act * scale + shift
        pool = jnp.maximum(jnp.maximum(pm[0:3], pm[3:6]),
                           jnp.maximum(pm[6:9], pm[9:12]))
        o_ref[bi] = jnp.concatenate([bn, pool], axis=0).reshape(16, th, Wo)


# --------------------------------------------------------------------------- shared wrapper pieces

def _finalize_stats(part, count_per_group, total_count, params):
    """part: (G, 13, 2) per-group [mean, M2] with equal group counts -> folded BN scale/shift."""
    mean_g = part[:, :, 0]
    m2_g = part[:, :, 1]
    mean = jnp.mean(mean_g, axis=0)                                        # (13,)
    m2 = jnp.sum(m2_g, axis=0) + count_per_group * jnp.sum((mean_g - mean[None, :]) ** 2, axis=0)
    var = jnp.maximum(m2 / total_count, 0.0)                               # biased (training BN)
    scale = params["bn_gamma"] * lax.rsqrt(var + BN_EPS)
    shift = params["bn_beta"] - mean * scale
    return scale, shift


def _cparams(sem):
    return pltpu.CompilerParams(dimension_semantics=sem, vmem_limit_bytes=_VMEM_LIMIT)


# --------------------------------------------------------------------------- forward: patches (fallback) path

@jax.jit
def _forward_patches(x, params):
    N, C, H, W = x.shape
    Ho, Wo = H // 2, W // 2
    S = Ho * Wo
    Bn, Mt, T, G = _plan_flat(N, S)

    # 2x2 stride-2 patch extraction via one fused XLA transpose: (N, 12, S), rows (kh, kw, cin).
    xr = x.reshape(N, C, Ho, 2, Wo, 2)
    patches = jnp.transpose(xr, (0, 3, 5, 1, 2, 4)).reshape(N, 4 * C, S)

    w_mat = jnp.transpose(params["conv_w"], (0, 2, 3, 1)).reshape(13, 4 * C)
    b_col = params["conv_b"].reshape(13, 1)
    alpha = params["prelu_a"].reshape(1)

    smem = pl.BlockSpec(memory_space=pltpu.MemorySpace.SMEM)
    p_spec = pl.BlockSpec((Bn, 12, Mt), lambda g, m: (g, 0, m))
    w_spec = pl.BlockSpec((13, 12), lambda g, m: (0, 0))

    part = pl.pallas_call(
        functools.partial(_stats_kernel_flat, S=S, Mt=Mt, Bn=Bn),
        out_shape=jax.ShapeDtypeStruct((G, 13, 2), jnp.float32),
        grid=(G, T),
        in_specs=[smem, p_spec, w_spec, pl.BlockSpec((13, 1), lambda g, m: (0, 0))],
        out_specs=pl.BlockSpec((1, 13, 2), lambda g, m: (g, 0, 0)),
        scratch_shapes=[pltpu.VMEM((13, 1), jnp.float32), pltpu.VMEM((13, 1), jnp.float32)],
        compiler_params=_cparams(("parallel", "arbitrary")),
        cost_estimate=pl.CostEstimate(flops=2 * 13 * 12 * N * S, transcendentals=0,
                                      bytes_accessed=12 * N * S * 4),
    )(alpha, patches, w_mat, b_col)

    scale, shift = _finalize_stats(part, float(Bn * S), float(N * S), params)
    aux = jnp.stack([params["conv_b"], scale, shift], axis=1)              # (13, 3)

    out = pl.pallas_call(
        functools.partial(_apply_kernel_flat, Bn=Bn),
        out_shape=jax.ShapeDtypeStruct((N, 16, S), jnp.float32),
        grid=(G, T),
        in_specs=[smem, p_spec, w_spec, pl.BlockSpec((13, 3), lambda g, m: (0, 0))],
        out_specs=pl.BlockSpec((Bn, 16, Mt), lambda g, m: (g, 0, m)),
        compiler_params=_cparams(("parallel", "parallel")),
        cost_estimate=pl.CostEstimate(flops=2 * 13 * 12 * N * S, transcendentals=0,
                                      bytes_accessed=(12 + 16) * N * S * 4),
    )(alpha, patches, w_mat, aux)

    return out.reshape(N, 16, Ho, Wo)                                      # free reshape


# --------------------------------------------------------------------------- forward: fused-extraction path

@jax.jit
def _forward_fused(x, params):
    N, C, H, W = x.shape
    Ho, Wo = H // 2, W // 2
    S = Ho * Wo
    Bn, th, Th, G = _plan_fused(N, Ho, Wo)

    # Free reshape: per output row oh, lanes are [input row 2oh | input row 2oh+1].
    xm = x.reshape(N, C, Ho, 2 * W)

    w_mat = jnp.transpose(params["conv_w"], (0, 2, 3, 1)).reshape(13, 4 * C)
    b_col = params["conv_b"].reshape(13, 1)
    alpha = params["prelu_a"].reshape(1)

    smem = pl.BlockSpec(memory_space=pltpu.MemorySpace.SMEM)
    x_spec = pl.BlockSpec((Bn, C, th, 2 * W), lambda g, m: (g, 0, m, 0))
    w_spec = pl.BlockSpec((13, 12), lambda g, m: (0, 0))

    part = pl.pallas_call(
        functools.partial(_stats_kernel_fused, W=W, Wo=Wo, Bn=Bn),
        out_shape=jax.ShapeDtypeStruct((G, 13, 2), jnp.float32),
        grid=(G, Th),
        in_specs=[smem, x_spec, w_spec, pl.BlockSpec((13, 1), lambda g, m: (0, 0))],
        out_specs=pl.BlockSpec((1, 13, 2), lambda g, m: (g, 0, 0)),
        scratch_shapes=[pltpu.VMEM((13, 1), jnp.float32), pltpu.VMEM((13, 1), jnp.float32)],
        compiler_params=_cparams(("parallel", "arbitrary")),
        cost_estimate=pl.CostEstimate(flops=2 * 13 * 12 * N * S, transcendentals=0,
                                      bytes_accessed=12 * N * S * 4),
    )(alpha, xm, w_mat, b_col)

    scale, shift = _finalize_stats(part, float(Bn * S), float(N * S), params)
    aux = jnp.stack([params["conv_b"], scale, shift], axis=1)              # (13, 3)

    out = pl.pallas_call(
        functools.partial(_apply_kernel_fused, W=W, Wo=Wo, Bn=Bn),
        out_shape=jax.ShapeDtypeStruct((N, 16, Ho, Wo), jnp.float32),
        grid=(G, Th),
        in_specs=[smem, x_spec, w_spec, pl.BlockSpec((13, 3), lambda g, m: (0, 0))],
        out_specs=pl.BlockSpec((Bn, 16, th, Wo), lambda g, m: (g, 0, m, 0)),
        compiler_params=_cparams(("parallel", "parallel")),
        cost_estimate=pl.CostEstimate(flops=2 * 13 * 12 * N * S, transcendentals=0,
                                      bytes_accessed=(12 + 16) * N * S * 4),
    )(alpha, xm, w_mat, aux)

    return out                                                             # already NCHW


# --------------------------------------------------------------------------- dispatch / params / reference

_FUSED_STATE = {"checked": False, "ok": False}


def _fused_available():
    """One-time probe: compile + numerically verify the fused path on a tiny eligible shape.
    (Runtime equivalent of the review's `pl.lower_as_mlir` check; falls back if unsupported.)"""
    if not _FUSED_STATE["checked"]:
        _FUSED_STATE["checked"] = True
        try:
            pp = init_params(jax.random.PRNGKey(7))
            xp = jax.random.normal(jax.random.PRNGKey(123), (1, 3, 16, 256), jnp.float32)
            got = jax.block_until_ready(_forward_fused(xp, pp))
            ref = _reference(xp, pp)
            _FUSED_STATE["ok"] = bool(jnp.allclose(got, ref, atol=1e-4, rtol=1e-4))
        except Exception:
            _FUSED_STATE["ok"] = False
    return _FUSED_STATE["ok"]


def initial_forward(x, params):
    """x: (N, 3, H, W) float32 NCHW. Returns (N, 16, H//2, W//2) NCHW (training-mode BN)."""
    N, C, H, W = x.shape
    assert C == 3 and H % 2 == 0 and W % 2 == 0, (N, C, H, W)
    if _plan_fused(N, H // 2, W // 2) is not None and _fused_available():
        try:
            return _forward_fused(x, params)
        except Exception:
            pass  # lowering not available for this shape -> use the patches path
    return _forward_patches(x, params)


def init_params(key):
    """Deterministic parameter init matching the PyTorch module's shapes/defaults."""
    k_w, k_b = jax.random.split(key)
    c_in, c_out, k = 3, 13, 2
    fan_in = c_in * k * k
    bound = 1.0 / jnp.sqrt(fan_in)
    return {
        "conv_w": jax.random.uniform(k_w, (c_out, c_in, k, k), jnp.float32, -bound, bound),
        "conv_b": jax.random.uniform(k_b, (c_out,), jnp.float32, -bound, bound),
        "prelu_a": jnp.array(0.25, jnp.float32),       # nn.PReLU default
        "bn_gamma": jnp.ones((c_out,), jnp.float32),   # nn.BatchNorm2d defaults
        "bn_beta": jnp.zeros((c_out,), jnp.float32),
    }


def _reference(x, params):
    """Pure-JAX reference mirroring the PyTorch forward (training-mode BN)."""
    conv = lax.conv_general_dilated(
        x, params["conv_w"], window_strides=(2, 2), padding="VALID",
        dimension_numbers=("NCHW", "OIHW", "NCHW"),
    ) + params["conv_b"][None, :, None, None]
    act = jnp.where(conv >= 0, conv, params["prelu_a"] * conv)
    mu = jnp.mean(act, axis=(0, 2, 3), keepdims=True)
    var = jnp.mean((act - mu) ** 2, axis=(0, 2, 3), keepdims=True)
    bn = (act - mu) * lax.rsqrt(var + BN_EPS)
    bn = bn * params["bn_gamma"][None, :, None, None] + params["bn_beta"][None, :, None, None]
    pool = lax.reduce_window(x, -jnp.inf, lax.max, (1, 1, 2, 2), (1, 1, 2, 2), "VALID")
    return jnp.concatenate([bn, pool], axis=1)


if __name__ == "__main__":
    key = jax.random.PRNGKey(0)
    k_param, k1, k2 = jax.random.split(key, 3)
    params = init_params(k_param)

    # Small shape from the module spec (exercises the generic patches path, grouped images).
    x1 = jax.random.normal(k1, (2, 3, 16, 16), jnp.float32)
    out1 = jax.block_until_ready(initial_forward(x1, params))
    ref1 = jax.block_until_ready(_reference(x1, params))
    assert out1.shape == (2, 16, 8, 8), out1.shape
    assert jnp.allclose(out1, ref1, atol=1e-4, rtol=1e-4), float(jnp.max(jnp.abs(out1 - ref1)))

    # Lane-aligned shape (exercises the fused in-kernel patch extraction when supported).
    x2 = jax.random.normal(k2, (1, 3, 32, 256), jnp.float32)
    out2 = jax.block_until_ready(initial_forward(x2, params))
    ref2 = jax.block_until_ready(_reference(x2, params))
    assert out2.shape == (1, 16, 16, 128), out2.shape
    assert jnp.allclose(out2, ref2, atol=1e-4, rtol=1e-4), float(jnp.max(jnp.abs(out2 - ref2)))

    print("KERNEL_OK")
</pallas_src>

<mosaic_0001>
module attributes {stable_mosaic.version = 11 : i64} {
  func.func @_stats_kernel_flat(%arg0: i32, %arg1: i32, %arg2: memref<1xf32, #tpu.memory_space<smem>>, %arg3: memref<2x12x64xf32, #tpu.memory_space<vmem>>, %arg4: memref<13x12xf32, #tpu.memory_space<vmem>>, %arg5: memref<13x1xf32, #tpu.memory_space<vmem>>, %arg6: memref<1x13x2xf32, #tpu.memory_space<vmem>>, %arg7: memref<13x1xf32, #tpu.memory_space<vmem>>, %arg8: memref<13x1xf32, #tpu.memory_space<vmem>>) attributes {dimension_semantics = [#tpu.dimension_semantics<parallel>, #tpu.dimension_semantics<arbitrary>], iteration_bounds = array<i64: 1, 1>, scalar_prefetch = 0 : i64, scratch_operands = 2 : i64, tpu.core_type = #tpu.core_type<tc>, window_params = [{transform_indices = @transform_0, window_bounds = array<i64: 1>}, {transform_indices = @transform_1, window_bounds = array<i64: 2, 12, 64>}, {pipeline_mode = #tpu.pipeline_mode<synchronous>, transform_indices = @transform_2, window_bounds = array<i64: 13, 12>}, {pipeline_mode = #tpu.pipeline_mode<synchronous>, transform_indices = @transform_3, window_bounds = array<i64: 13, 1>}, {transform_indices = @transform_4, window_bounds = array<i64: 1, 13, 2>}]} {
    %c0_i32 = arith.constant 0 : i32
    %0 = arith.cmpi eq, %arg1, %c0_i32 : i32
    %1 = arith.extui %0 : i1 to i32
    %c0_i32_0 = arith.constant 0 : i32
    %2 = arith.cmpi ne, %1, %c0_i32_0 : i32
    scf.if %2 {
      %cst_50 = arith.constant 0.000000e+00 : f32
      %116 = vector.broadcast %cst_50 : f32 to vector<13x1xf32>
      %c0_51 = arith.constant 0 : index
      %c0_52 = arith.constant 0 : index
      %117 = vector.load %arg7[%c0_51, %c0_52] : memref<13x1xf32, #tpu.memory_space<vmem>>, vector<13x1xf32>
      tpu.vector_store %arg7[%c0_51, %c0_52], %116 {strides = array<i32>} : memref<13x1xf32, #tpu.memory_space<vmem>>, vector<13x1xf32>,
      %cst_53 = arith.constant 0.000000e+00 : f32
      %118 = vector.broadcast %cst_53 : f32 to vector<13x1xf32>
      %c0_54 = arith.constant 0 : index
      %c0_55 = arith.constant 0 : index
      %119 = vector.load %arg8[%c0_54, %c0_55] : memref<13x1xf32, #tpu.memory_space<vmem>>, vector<13x1xf32>
      tpu.vector_store %arg8[%c0_54, %c0_55], %118 {strides = array<i32>} : memref<13x1xf32, #tpu.memory_space<vmem>>, vector<13x1xf32>,
    } else {
    }
    %c64_i32 = arith.constant 64 : i32
    %3 = arith.muli %arg1, %c64_i32 : i32
    %4 = tpu.iota {dimensions = array<i32: 1>} : vector<1x64xi32>
    %5 = vector.broadcast %3 : i32 to vector<1x64xi32>
    %6 = arith.addi %5, %4 : vector<1x64xi32>
    %c64_i32_1 = arith.constant 64 : i32
    %7 = vector.broadcast %c64_i32_1 : i32 to vector<1x64xi32>
    %8 = arith.cmpi slt, %6, %7 : vector<1x64xi32>
    %c64_i32_2 = arith.constant 64 : i32
    %9 = arith.subi %c64_i32_2, %3 : i32
    %c64_i32_3 = arith.constant 64 : i32
    %10 = arith.minsi %9, %c64_i32_3 : i32
    %11 = arith.sitofp %10 : i32 to f32
    %c0 = arith.constant 0 : index
    %12 = memref.load %arg2[%c0] : memref<1xf32, #tpu.memory_space<smem>>
    %c0_4 = arith.constant 0 : index
    %c0_5 = arith.constant 0 : index
    %13 = vector.load %arg4[%c0_4, %c0_5] : memref<13x12xf32, #tpu.memory_space<vmem>>, vector<13x12xf32>
    %c0_6 = arith.constant 0 : index
    %c0_7 = arith.constant 0 : index
    %14 = vector.load %arg5[%c0_6, %c0_7] : memref<13x1xf32, #tpu.memory_space<vmem>>, vector<13x1xf32>
    %c0_8 = arith.constant 0 : index
    %c0_9 = arith.constant 0 : index
    %c0_10 = arith.constant 0 : index
    %15 = vector.load %arg3[%c0_8, %c0_9, %c0_10] : memref<2x12x64xf32, #tpu.memory_space<vmem>>, vector<1x12x64xf32>
    %16 = vector.shape_cast %15 : vector<1x12x64xf32> to vector<12x64xf32>
    %cst = arith.constant dense<0.000000e+00> : vector<13x64xf32>
    %17 = tpu.matmul %13, %16, %cst {dimension_numbers = #tpu.dot_dimension_numbers<[1], [0], [0], [1], [0, 0, 1, 1], [], []>} : vector<13x12xf32>, vector<12x64xf32>, vector<13x64xf32> -> vector<13x64xf32>
    %18 = vector.broadcast %14 : vector<13x1xf32> to vector<13x64xf32>
    %19 = arith.addf %17, %18 : vector<13x64xf32>
    %cst_11 = arith.constant 0.000000e+00 : f32
    %20 = vector.broadcast %cst_11 : f32 to vector<13x64xf32>
    %21 = arith.cmpf oge, %19, %20 : vector<13x64xf32>
    %22 = vector.broadcast %12 : f32 to vector<13x64xf32>
    %23 = arith.mulf %22, %19 : vector<13x64xf32>
    %24 = arith.select %21, %19, %23 : vector<13x64xi1>, vector<13x64xf32>
    %cst_12 = arith.constant 0.000000e+00 : f32
    %25 = vector.shape_cast %8 : vector<1x64xi1> to vector<1x64xi1>
    %26 = vector.broadcast %25 : vector<1x64xi1> to vector<13x64xi1>
    %27 = vector.broadcast %cst_12 : f32 to vector<13x64xf32>
    %28 = arith.select %26, %24, %27 : vector<13x64xi1>, vector<13x64xf32>
    %cst_13 = arith.constant dense<0.000000e+00> : vector<13xf32>
    %29 = vector.multi_reduction <add>, %28, %cst_13 [1] : vector<13x64xf32> to vector<13xf32>
    %30 = vector.shape_cast %29 : vector<13xf32> to vector<13x1xf32>
    %31 = vector.broadcast %11 : f32 to vector<13x1xf32>
    %32 = arith.divf %30, %31 : vector<13x1xf32>
    %33 = vector.broadcast %32 : vector<13x1xf32> to vector<13x64xf32>
    %34 = arith.subf %24, %33 : vector<13x64xf32>
    %cst_14 = arith.constant 0.000000e+00 : f32
    %35 = vector.shape_cast %8 : vector<1x64xi1> to vector<1x64xi1>
    %36 = vector.broadcast %35 : vector<1x64xi1> to vector<13x64xi1>
    %37 = vector.broadcast %cst_14 : f32 to vector<13x64xf32>
    %38 = arith.select %36, %34, %37 : vector<13x64xi1>, vector<13x64xf32>
    %39 = arith.mulf %38, %38 : vector<13x64xf32>
    %cst_15 = arith.constant dense<0.000000e+00> : vector<13xf32>
    %40 = vector.multi_reduction <add>, %39, %cst_15 [1] : vector<13x64xf32> to vector<13xf32>
    %41 = vector.shape_cast %40 : vector<13xf32> to vector<13x1xf32>
    %42 = arith.sitofp %arg1 : i32 to f32
    %cst_16 = arith.constant 1.280000e+02 : f32
    %43 = arith.mulf %42, %cst_16 : f32
    %cst_17 = arith.constant 0.000000e+00 : f32
    %44 = arith.mulf %cst_17, %11 : f32
    %45 = arith.addf %43, %44 : f32
    %46 = arith.addf %45, %11 : f32
    %c0_18 = arith.constant 0 : index
    %c0_19 = arith.constant 0 : index
    %47 = vector.load %arg7[%c0_18, %c0_19] : memref<13x1xf32, #tpu.memory_space<vmem>>, vector<13x1xf32>
    %48 = arith.subf %32, %47 : vector<13x1xf32>
    %c0_20 = arith.constant 0 : index
    %c0_21 = arith.constant 0 : index
    %49 = vector.load %arg7[%c0_20, %c0_21] : memref<13x1xf32, #tpu.memory_space<vmem>>, vector<13x1xf32>
    %50 = arith.divf %11, %46 : f32
    %51 = vector.broadcast %50 : f32 to vector<13x1xf32>
    %52 = arith.mulf %48, %51 : vector<13x1xf32>
    %53 = arith.addf %49, %52 : vector<13x1xf32>
    %c0_22 = arith.constant 0 : index
    %c0_23 = arith.constant 0 : index
    %54 = vector.load %arg7[%c0_22, %c0_23] : memref<13x1xf32, #tpu.memory_space<vmem>>, vector<13x1xf32>
    tpu.vector_store %arg7[%c0_22, %c0_23], %53 {strides = array<i32>} : memref<13x1xf32, #tpu.memory_space<vmem>>, vector<13x1xf32>,
    %c0_24 = arith.constant 0 : index
    %c0_25 = arith.constant 0 : index
    %55 = vector.load %arg8[%c0_24, %c0_25] : memref<13x1xf32, #tpu.memory_space<vmem>>, vector<13x1xf32>
    %56 = arith.addf %55, %41 : vector<13x1xf32>
    %57 = arith.mulf %48, %48 : vector<13x1xf32>
    %58 = arith.mulf %45, %11 : f32
    %59 = arith.divf %58, %46 : f32
    %60 = vector.broadcast %59 : f32 to vector<13x1xf32>
    %61 = arith.mulf %57, %60 : vector<13x1xf32>
    %62 = arith.addf %56, %61 : vector<13x1xf32>
    %c0_26 = arith.constant 0 : index
    %c0_27 = arith.constant 0 : index
    %63 = vector.load %arg8[%c0_26, %c0_27] : memref<13x1xf32, #tpu.memory_space<vmem>>, vector<13x1xf32>
    tpu.vector_store %arg8[%c0_26, %c0_27], %62 {strides = array<i32>} : memref<13x1xf32, #tpu.memory_space<vmem>>, vector<13x1xf32>,
    %c1 = arith.constant 1 : index
    %c0_28 = arith.constant 0 : index
    %c0_29 = arith.constant 0 : index
    %64 = vector.load %arg3[%c1, %c0_28, %c0_29] : memref<2x12x64xf32, #tpu.memory_space<vmem>>, vector<1x12x64xf32>
    %65 = vector.shape_cast %64 : vector<1x12x64xf32> to vector<12x64xf32>
    %cst_30 = arith.constant dense<0.000000e+00> : vector<13x64xf32>
    %66 = tpu.matmul %13, %65, %cst_30 {dimension_numbers = #tpu.dot_dimension_numbers<[1], [0], [0], [1], [0, 0, 1, 1], [], []>} : vector<13x12xf32>, vector<12x64xf32>, vector<13x64xf32> -> vector<13x64xf32>
    %67 = vector.broadcast %14 : vector<13x1xf32> to vector<13x64xf32>
    %68 = arith.addf %66, %67 : vector<13x64xf32>
    %cst_31 = arith.constant 0.000000e+00 : f32
    %69 = vector.broadcast %cst_31 : f32 to vector<13x64xf32>
    %70 = arith.cmpf oge, %68, %69 : vector<13x64xf32>
    %71 = vector.broadcast %12 : f32 to vector<13x64xf32>
    %72 = arith.mulf %71, %68 : vector<13x64xf32>
    %73 = arith.select %70, %68, %72 : vector<13x64xi1>, vector<13x64xf32>
    %cst_32 = arith.constant 0.000000e+00 : f32
    %74 = vector.shape_cast %8 : vector<1x64xi1> to vector<1x64xi1>
    %75 = vector.broadcast %74 : vector<1x64xi1> to vector<13x64xi1>
    %76 = vector.broadcast %cst_32 : f32 to vector<13x64xf32>
    %77 = arith.select %75, %73, %76 : vector<13x64xi1>, vector<13x64xf32>
    %cst_33 = arith.constant dense<0.000000e+00> : vector<13xf32>
    %78 = vector.multi_reduction <add>, %77, %cst_33 [1] : vector<13x64xf32> to vector<13xf32>
    %79 = vector.shape_cast %78 : vector<13xf32> to vector<13x1xf32>
    %80 = vector.broadcast %11 : f32 to vector<13x1xf32>
    %81 = arith.divf %79, %80 : vector<13x1xf32>
    %82 = vector.broadcast %81 : vector<13x1xf32> to vector<13x64xf32>
    %83 = arith.subf %73, %82 : vector<13x64xf32>
    %cst_34 = arith.constant 0.000000e+00 : f32
    %84 = vector.shape_cast %8 : vector<1x64xi1> to vector<1x64xi1>
    %85 = vector.broadcast %84 : vector<1x64xi1> to vector<13x64xi1>
    %86 = vector.broadcast %cst_34 : f32 to vector<13x64xf32>
    %87 = arith.select %85, %83, %86 : vector<13x64xi1>, vector<13x64xf32>
    %88 = arith.mulf %87, %87 : vector<13x64xf32>
    %cst_35 = arith.constant dense<0.000000e+00> : vector<13xf32>
    %89 = vector.multi_reduction <add>, %88, %cst_35 [1] : vector<13x64xf32> to vector<13xf32>
    %90 = vector.shape_cast %89 : vector<13xf32> to vector<13x1xf32>
    %91 = arith.sitofp %arg1 : i32 to f32
    %cst_36 = arith.constant 1.280000e+02 : f32
    %92 = arith.mulf %91, %cst_36 : f32
    %cst_37 = arith.constant 1.000000e+00 : f32
    %93 = arith.mulf %cst_37, %11 : f32
    %94 = arith.addf %92, %93 : f32
    %95 = arith.addf %94, %11 : f32
    %c0_38 = arith.constant 0 : index
    %c0_39 = arith.constant 0 : index
    %96 = vector.load %arg7[%c0_38, %c0_39] : memref<13x1xf32, #tpu.memory_space<vmem>>, vector<13x1xf32>
    %97 = arith.subf %81, %96 : vector<13x1xf32>
    %c0_40 = arith.constant 0 : index
    %c0_41 = arith.constant 0 : index
    %98 = vector.load %arg7[%c0_40, %c0_41] : memref<13x1xf32, #tpu.memory_space<vmem>>, vector<13x1xf32>
    %99 = arith.divf %11, %95 : f32
    %100 = vector.broadcast %99 : f32 to vector<13x1xf32>
    %101 = arith.mulf %97, %100 : vector<13x1xf32>
    %102 = arith.addf %98, %101 : vector<13x1xf32>
    %c0_42 = arith.constant 0 : index
    %c0_43 = arith.constant 0 : index
    %103 = vector.load %arg7[%c0_42, %c0_43] : memref<13x1xf32, #tpu.memory_space<vmem>>, vector<13x1xf32>
    tpu.vector_store %arg7[%c0_42, %c0_43], %102 {strides = array<i32>} : memref<13x1xf32, #tpu.memory_space<vmem>>, vector<13x1xf32>,
    %c0_44 = arith.constant 0 : index
    %c0_45 = arith.constant 0 : index
    %104 = vector.load %arg8[%c0_44, %c0_45] : memref<13x1xf32, #tpu.memory_space<vmem>>, vector<13x1xf32>
    %105 = arith.addf %104, %90 : vector<13x1xf32>
    %106 = arith.mulf %97, %97 : vector<13x1xf32>
    %107 = arith.mulf %94, %11 : f32
    %108 = arith.divf %107, %95 : f32
    %109 = vector.broadcast %108 : f32 to vector<13x1xf32>
    %110 = arith.mulf %106, %109 : vector<13x1xf32>
    %111 = arith.addf %105, %110 : vector<13x1xf32>
    %c0_46 = arith.constant 0 : index
    %c0_47 = arith.constant 0 : index
    %112 = vector.load %arg8[%c0_46, %c0_47] : memref<13x1xf32, #tpu.memory_space<vmem>>, vector<13x1xf32>
    tpu.vector_store %arg8[%c0_46, %c0_47], %111 {strides = array<i32>} : memref<13x1xf32, #tpu.memory_space<vmem>>, vector<13x1xf32>,
    %c0_i32_48 = arith.constant 0 : i32
    %113 = arith.cmpi eq, %arg1, %c0_i32_48 : i32
    %114 = arith.extui %113 : i1 to i32
    %c0_i32_49 = arith.constant 0 : i32
    %115 = arith.cmpi ne, %114, %c0_i32_49 : i32
    scf.if %115 {
      %c0_50 = arith.constant 0 : index
      %c0_51 = arith.constant 0 : index
      %116 = vector.load %arg7[%c0_50, %c0_51] : memref<13x1xf32, #tpu.memory_space<vmem>>, vector<13x1xf32>
      %c0_52 = arith.constant 0 : index
      %c0_53 = arith.constant 0 : index
      %117 = vector.load %arg8[%c0_52, %c0_53] : memref<13x1xf32, #tpu.memory_space<vmem>>, vector<13x1xf32>
      %118 = tpu.concatenate %116, %117 in 1 : vector<13x1xf32>, vector<13x1xf32> -> vector<13x2xf32>
      %c0_54 = arith.constant 0 : index
      %c0_55 = arith.constant 0 : index
      %c0_56 = arith.constant 0 : index
      %119 = vector.load %arg6[%c0_54, %c0_55, %c0_56] : memref<1x13x2xf32, #tpu.memory_space<vmem>>, vector<1x13x2xf32>
      %120 = vector.shape_cast %119 : vector<1x13x2xf32> to vector<13x2xf32>
      %121 = vector.shape_cast %118 : vector<13x2xf32> to vector<1x13x2xf32>
      tpu.vector_store %arg6[%c0_54, %c0_55, %c0_56], %121 {strides = array<i32>} : memref<1x13x2xf32, #tpu.memory_space<vmem>>, vector<1x13x2xf32>,
    } else {
    }
    return
  }
  func.func @transform_0(%arg0: i32, %arg1: i32) -> i32 {
    %c0_i32 = arith.constant 0 : i32
    %c0_i32_0 = arith.constant 0 : i32
    return %c0_i32 : i32
  }
  func.func @transform_1(%arg0: i32, %arg1: i32) -> (i32, i32, i32) {
    %c0_i32 = arith.constant 0 : i32
    %c0_i32_0 = arith.constant 0 : i32
    return %arg0, %c0_i32, %arg1 : i32, i32, i32
  }
  func.func @transform_2(%arg0: i32, %arg1: i32) -> (i32, i32) {
    %c0_i32 = arith.constant 0 : i32
    %c0_i32_0 = arith.constant 0 : i32
    %c0_i32_1 = arith.constant 0 : i32
    return %c0_i32, %c0_i32_0 : i32, i32
  }
  func.func @transform_3(%arg0: i32, %arg1: i32) -> (i32, i32) {
    %c0_i32 = arith.constant 0 : i32
    %c0_i32_0 = arith.constant 0 : i32
    %c0_i32_1 = arith.constant 0 : i32
    return %c0_i32, %c0_i32_0 : i32, i32
  }
  func.func @transform_4(%arg0: i32, %arg1: i32) -> (i32, i32, i32) {
    %c0_i32 = arith.constant 0 : i32
    %c0_i32_0 = arith.constant 0 : i32
    %c0_i32_1 = arith.constant 0 : i32
    return %arg0, %c0_i32, %c0_i32_0 : i32, i32, i32
  }
}

module attributes {stable_mosaic.version = 11 : i64} {
  func.func @_apply_kernel_flat(%arg0: i32, %arg1: i32, %arg2: memref<1xf32, #tpu.memory_space<smem>>, %arg3: memref<2x12x64xf32, #tpu.memory_space<vmem>>, %arg4: memref<13x12xf32, #tpu.memory_space<vmem>>, %arg5: memref<13x3xf32, #tpu.memory_space<vmem>>, %arg6: memref<2x16x64xf32, #tpu.memory_space<vmem>>) attributes {dimension_semantics = [#tpu.dimension_semantics<parallel>, #tpu.dimension_semantics<parallel>], iteration_bounds = array<i64: 1, 1>, scalar_prefetch = 0 : i64, scratch_operands = 0 : i64, tpu.core_type = #tpu.core_type<tc>, window_params = [{transform_indices = @transform_0, window_bounds = array<i64: 1>}, {transform_indices = @transform_1, window_bounds = array<i64: 2, 12, 64>}, {pipeline_mode = #tpu.pipeline_mode<synchronous>, transform_indices = @transform_2, window_bounds = array<i64: 13, 12>}, {pipeline_mode = #tpu.pipeline_mode<synchronous>, transform_indices = @transform_3, window_bounds = array<i64: 13, 3>}, {transform_indices = @transform_4, window_bounds = array<i64: 2, 16, 64>}]} {
    %c0 = arith.constant 0 : index
    %0 = memref.load %arg2[%c0] : memref<1xf32, #tpu.memory_space<smem>>
    %c0_0 = arith.constant 0 : index
    %c0_1 = arith.constant 0 : index
    %1 = vector.load %arg4[%c0_0, %c0_1] : memref<13x12xf32, #tpu.memory_space<vmem>>, vector<13x12xf32>
    %c0_2 = arith.constant 0 : index
    %c0_3 = arith.constant 0 : index
    %2 = vector.load %arg5[%c0_2, %c0_3] : memref<13x3xf32, #tpu.memory_space<vmem>>, vector<13x3xf32>
    %3 = vector.extract_strided_slice %2 {offsets = [0, 0], sizes = [13, 1], strides = [1, 1]} : vector<13x3xf32> to vector<13x1xf32>
    %4 = vector.extract_strided_slice %2 {offsets = [0, 1], sizes = [13, 1], strides = [1, 1]} : vector<13x3xf32> to vector<13x1xf32>
    %5 = vector.extract_strided_slice %2 {offsets = [0, 2], sizes = [13, 1], strides = [1, 1]} : vector<13x3xf32> to vector<13x1xf32>
    %c0_4 = arith.constant 0 : index
    %c0_5 = arith.constant 0 : index
    %c0_6 = arith.constant 0 : index
    %6 = vector.load %arg3[%c0_4, %c0_5, %c0_6] : memref<2x12x64xf32, #tpu.memory_space<vmem>>, vector<1x12x64xf32>
    %7 = vector.shape_cast %6 : vector<1x12x64xf32> to vector<12x64xf32>
    %cst = arith.constant dense<0.000000e+00> : vector<13x64xf32>
    %8 = tpu.matmul %1, %7, %cst {dimension_numbers = #tpu.dot_dimension_numbers<[1], [0], [0], [1], [0, 0, 1, 1], [], []>} : vector<13x12xf32>, vector<12x64xf32>, vector<13x64xf32> -> vector<13x64xf32>
    %9 = vector.broadcast %3 : vector<13x1xf32> to vector<13x64xf32>
    %10 = arith.addf %8, %9 : vector<13x64xf32>
    %cst_7 = arith.constant 0.000000e+00 : f32
    %11 = vector.broadcast %cst_7 : f32 to vector<13x64xf32>
    %12 = arith.cmpf oge, %10, %11 : vector<13x64xf32>
    %13 = vector.broadcast %0 : f32 to vector<13x64xf32>
    %14 = arith.mulf %13, %10 : vector<13x64xf32>
    %15 = arith.select %12, %10, %14 : vector<13x64xi1>, vector<13x64xf32>
    %16 = vector.broadcast %4 : vector<13x1xf32> to vector<13x64xf32>
    %17 = arith.mulf %15, %16 : vector<13x64xf32>
    %18 = vector.broadcast %5 : vector<13x1xf32> to vector<13x64xf32>
    %19 = arith.addf %17, %18 : vector<13x64xf32>
    %20 = vector.extract_strided_slice %7 {offsets = [0, 0], sizes = [3, 64], strides = [1, 1]} : vector<12x64xf32> to vector<3x64xf32>
    %21 = vector.extract_strided_slice %7 {offsets = [3, 0], sizes = [3, 64], strides = [1, 1]} : vector<12x64xf32> to vector<3x64xf32>
    %22 = arith.maximumf %20, %21 : vector<3x64xf32>
    %23 = vector.extract_strided_slice %7 {offsets = [6, 0], sizes = [3, 64], strides = [1, 1]} : vector<12x64xf32> to vector<3x64xf32>
    %24 = vector.extract_strided_slice %7 {offsets = [9, 0], sizes = [3, 64], strides = [1, 1]} : vector<12x64xf32> to vector<3x64xf32>
    %25 = arith.maximumf %23, %24 : vector<3x64xf32>
    %26 = arith.maximumf %22, %25 : vector<3x64xf32>
    %27 = tpu.concatenate %19, %26 in 0 : vector<13x64xf32>, vector<3x64xf32> -> vector<16x64xf32>
    %c0_8 = arith.constant 0 : index
    %c0_9 = arith.constant 0 : index
    %c0_10 = arith.constant 0 : index
    %28 = vector.load %arg6[%c0_8, %c0_9, %c0_10] : memref<2x16x64xf32, #tpu.memory_space<vmem>>, vector<1x16x64xf32>
    %29 = vector.shape_cast %28 : vector<1x16x64xf32> to vector<16x64xf32>
    %30 = vector.shape_cast %27 : vector<16x64xf32> to vector<1x16x64xf32>
    tpu.vector_store %arg6[%c0_8, %c0_9, %c0_10], %30 {strides = array<i32>} : memref<2x16x64xf32, #tpu.memory_space<vmem>>, vector<1x16x64xf32>,
    %c1 = arith.constant 1 : index
    %c0_11 = arith.constant 0 : index
    %c0_12 = arith.constant 0 : index
    %31 = vector.load %arg3[%c1, %c0_11, %c0_12] : memref<2x12x64xf32, #tpu.memory_space<vmem>>, vector<1x12x64xf32>
    %32 = vector.shape_cast %31 : vector<1x12x64xf32> to vector<12x64xf32>
    %cst_13 = arith.constant dense<0.000000e+00> : vector<13x64xf32>
    %33 = tpu.matmul %1, %32, %cst_13 {dimension_numbers = #tpu.dot_dimension_numbers<[1], [0], [0], [1], [0, 0, 1, 1], [], []>} : vector<13x12xf32>, vector<12x64xf32>, vector<13x64xf32> -> vector<13x64xf32>
    %34 = vector.broadcast %3 : vector<13x1xf32> to vector<13x64xf32>
    %35 = arith.addf %33, %34 : vector<13x64xf32>
    %cst_14 = arith.constant 0.000000e+00 : f32
    %36 = vector.broadcast %cst_14 : f32 to vector<13x64xf32>
    %37 = arith.cmpf oge, %35, %36 : vector<13x64xf32>
    %38 = vector.broadcast %0 : f32 to vector<13x64xf32>
    %39 = arith.mulf %38, %35 : vector<13x64xf32>
    %40 = arith.select %37, %35, %39 : vector<13x64xi1>, vector<13x64xf32>
    %41 = vector.broadcast %4 : vector<13x1xf32> to vector<13x64xf32>
    %42 = arith.mulf %40, %41 : vector<13x64xf32>
    %43 = vector.broadcast %5 : vector<13x1xf32> to vector<13x64xf32>
    %44 = arith.addf %42, %43 : vector<13x64xf32>
    %45 = vector.extract_strided_slice %32 {offsets = [0, 0], sizes = [3, 64], strides = [1, 1]} : vector<12x64xf32> to vector<3x64xf32>
    %46 = vector.extract_strided_slice %32 {offsets = [3, 0], sizes = [3, 64], strides = [1, 1]} : vector<12x64xf32> to vector<3x64xf32>
    %47 = arith.maximumf %45, %46 : vector<3x64xf32>
    %48 = vector.extract_strided_slice %32 {offsets = [6, 0], sizes = [3, 64], strides = [1, 1]} : vector<12x64xf32> to vector<3x64xf32>
    %49 = vector.extract_strided_slice %32 {offsets = [9, 0], sizes = [3, 64], strides = [1, 1]} : vector<12x64xf32> to vector<3x64xf32>
    %50 = arith.maximumf %48, %49 : vector<3x64xf32>
    %51 = arith.maximumf %47, %50 : vector<3x64xf32>
    %52 = tpu.concatenate %44, %51 in 0 : vector<13x64xf32>, vector<3x64xf32> -> vector<16x64xf32>
    %c1_15 = arith.constant 1 : index
    %c0_16 = arith.constant 0 : index
    %c0_17 = arith.constant 0 : index
    %53 = vector.load %arg6[%c1_15, %c0_16, %c0_17] : memref<2x16x64xf32, #tpu.memory_space<vmem>>, vector<1x16x64xf32>
    %54 = vector.shape_cast %53 : vector<1x16x64xf32> to vector<16x64xf32>
    %55 = vector.shape_cast %52 : vector<16x64xf32> to vector<1x16x64xf32>
    tpu.vector_store %arg6[%c1_15, %c0_16, %c0_17], %55 {strides = array<i32>} : memref<2x16x64xf32, #tpu.memory_space<vmem>>, vector<1x16x64xf32>,
    return
  }
  func.func @transform_0(%arg0: i32, %arg1: i32) -> i32 {
    %c0_i32 = arith.constant 0 : i32
    %c0_i32_0 = arith.constant 0 : i32
    return %c0_i32 : i32
  }
  func.func @transform_1(%arg0: i32, %arg1: i32) -> (i32, i32, i32) {
    %c0_i32 = arith.constant 0 : i32
    %c0_i32_0 = arith.constant 0 : i32
    return %arg0, %c0_i32, %arg1 : i32, i32, i32
  }
  func.func @transform_2(%arg0: i32, %arg1: i32) -> (i32, i32) {
    %c0_i32 = arith.constant 0 : i32
    %c0_i32_0 = arith.constant 0 : i32
    %c0_i32_1 = arith.constant 0 : i32
    return %c0_i32, %c0_i32_0 : i32, i32
  }
  func.func @transform_3(%arg0: i32, %arg1: i32) -> (i32, i32) {
    %c0_i32 = arith.constant 0 : i32
    %c0_i32_0 = arith.constant 0 : i32
    %c0_i32_1 = arith.constant 0 : i32
    return %c0_i32, %c0_i32_0 : i32, i32
  }
  func.func @transform_4(%arg0: i32, %arg1: i32) -> (i32, i32, i32) {
    %c0_i32 = arith.constant 0 : i32
    %c0_i32_0 = arith.constant 0 : i32
    return %arg0, %c0_i32, %arg1 : i32, i32, i32
  }
}

</mosaic_0001>

<llo_original>
// kernel: _forward_patches.3
$region0: #{_forward_patches.3}
  #allocation0 [shape = 'u32[]', space=smem, size = 0x4, offset = 0x4, fixed_abs, tag = 'smem constant byte address 0x4 - core index']
  #allocation1 [shape = 'u32[72,128]{1,0:T(1,128)}', space=vmem, size = 0x9000, scoped, tag = 'internal scratch']
  #allocation2 [shape = 'f32[1]{0:T(128)S(6)}', space=smem, size = 0x200, scoped, tag = 'scoped memory for _forward_patches.3']
  %s0 = inlined_call_operand.<no memory space> [shape: f32[1], index: 0, kind: input, shape index: {}]
  %s1 = inlined_call_operand.vmem [shape: f32[2,12,64], index: 1, kind: input, shape index: {}]
  %s2 = inlined_call_operand.vmem [shape: f32[13,12], index: 2, kind: input, shape index: {}]
  %s3 = inlined_call_operand.vmem [shape: f32[13,3], index: 3, kind: input, shape index: {}]
  %s4 = inlined_call_operand.vmem [shape: f32[2,16,64], index: 4, kind: output, shape index: {}]
  %s5 = sld [smem:[#allocation0]]
  $region26: #{_forward_patches.3} parent=0
    _
  %s7 = ssub.s32 1, %s5
  %s8 = scalar_select 0, %s7, %s5
  %9 = sst [smem:[#allocation2]] %s0
  // Predicated region
  $region2: #{_forward_patches.3} parent=0 // pred_check
    _
  $region3: #{_forward_patches.3} parent=0 // pred_check_branch
    %11 = sbr.rel (0) target = $region5
  $region4: #{_forward_patches.3} parent=0 // pred_region
    _
  $region5: #{_forward_patches.3} parent=0 // pred_fallthru
    _
  // Predicated region
  $region6: #{_forward_patches.3} parent=0 // pred_check
    _
  $region7: #{_forward_patches.3} parent=0 // pred_check_branch
    %13 = sbr.rel (0) target = $region9
  $region8: #{_forward_patches.3} parent=0 // pred_region
    _
  $region9: #{_forward_patches.3} parent=0 // pred_fallthru
    _
  // Predicated region
  $region10: #{_forward_patches.3} parent=0 // pred_check
    _
  $region11: #{_forward_patches.3} parent=0 // pred_check_branch
    %15 = sbr.rel (0) target = $region13
  $region12: #{_forward_patches.3} parent=0 // pred_region
    _
  $region13: #{_forward_patches.3} parent=0 // pred_fallthru
    _
  // Predicated region
  $region14: #{_forward_patches.3} parent=0 // pred_check
    _
  $region15: #{_forward_patches.3} parent=0 // pred_check_branch
    %17 = sbr.rel (0) target = $region17
  $region16: #{_forward_patches.3} parent=0 // pred_region
    _
  $region17: #{_forward_patches.3} parent=0 // pred_fallthru
    _
  %s18 = sld [smem:[#allocation2]]
  %v19 = vld [vmem:[%s2] sm:$0xff]
  %v20 = vld [vmem:[%s2 + $0x8] sm:$0x1f]
  %v21 = vld [vmem:[%s3] sm:$0xff]
  %v22 = vld [vmem:[%s3 + $0x8] sm:$0x1f]
  %v23 = vld [vmem:[%s1] sm:$0xff]
  %v24 = vld [vmem:[%s1 + $0x8] sm:$0xf]
  %26 = vset.pattern.permute.xlu0 0
  %27 = vperm.xlu0 %26, %v21
  %v28 = vpop.permute.xlu0 %27
  %31 = vset.pattern.permute.xlu0 0
  %32 = vperm.xlu0 %31, %v22
  %v33 = vpop.permute.xlu0 %32
  %vm35 = vcmask 97280
  %v37 = vsel %vm35, %v19, 0
  %v40 = vsel %vm35, %v20, 0
  %vm42 = vcmask 1043456
  %v44 = vsel %vm42, %v24, 0
  %46 = vmatpush.msra.mxu0 0.0
  %47 = vmatpush.msra.mxu0 0.0
  %48 = vmatpush.msra.mxu0 0.0
  %49 = vmatpush.msra.mxu0 0.0
  %50 = vmatpush.msra.mxu0 0.0
  %51 = vmatpush.msra.mxu0 0.0
  %52 = vmatpush.msra.mxu0 0.0
  %53 = vmatpush.msra.mxu0 0.0
  %54 = vmatpush.msra.mxu0 0.0
  %55 = vmatpush.msra.mxu0 0.0
  %56 = vmatpush.msra.mxu0 0.0
  %57 = vmatpush.msra.mxu0 0.0
  %58 = vmatpush.msra.mxu0 0.0
  %59 = vmatpush.msra.mxu0 0.0
  %60 = vmatpush.msra.mxu0 %v44
  %61 = vmatpush.msra.mxu0 %v23
  %62 = vmatmul.f32.gmra.mxu0 %v37
  %v63 = vpop.f32.mrf.mxu0
  %v64 = vadd.f32 %v28, %v63
  %65 = vmatmul.f32.gmra.mxu0 %v40
  %v66 = vpop.f32.mrf.mxu0
  %v67 = vadd.f32 %v33, %v66
  %68 = vdwg.mxu0
  %vm69 = vcmp.ge.f32.partialorder %v64, 0.0
  %vm70 = vcmp.ge.f32.partialorder %v67, 0.0
  %v71 = vstv %s18
  %v72 = vmul.f32 %v71, %v64
  %v73 = vmul.f32 %v71, %v67
  %v74 = vsel %vm69, %v64, %v72
  %v75 = vsel %vm70, %v67, %v73
  %76 = vset.pattern.permute.xlu0 1
  %77 = vperm.xlu0 %76, %v21
  %v78 = vpop.permute.xlu0 %77
  %80 = vset.pattern.permute.xlu0 1
  %81 = vperm.xlu0 %80, %v22
  %v82 = vpop.permute.xlu0 %81
  %v84 = vmul.f32 %v74, %v78
  %v85 = vmul.f32 %v75, %v82
  %86 = vset.pattern.permute.xlu0 2
  %87 = vperm.xlu0 %86, %v21
  %v88 = vpop.permute.xlu0 %87
  %90 = vset.pattern.permute.xlu0 2
  %91 = vperm.xlu0 %90, %v22
  %v92 = vpop.permute.xlu0 %91
  %v94 = vadd.f32 %v84, %v88
  %v95 = vadd.f32 %v85, %v92
  %v97 = vrot.slane %v23, 3
  %v99 = vmax.f32 %v23, %v97
  %v100 = vrot.slane %v24, 3
  %v102 = vmax.f32 %v23, %v100
  %v103 = vmax.f32 %v24, %v100
  %vm106 = vcmask 1041408
  %v107 = vrot.slane %v102, 6
  %v108 = vrot.slane %v103, 6
  %v109 = vsel %vm106, %v107, %v108
  %v111 = vmax.f32 %v99, %v109
  %v113 = vrot.slane %v111, 3
  %vm115 = vcmask 1044480
  %v116 = vsel %vm115, %v95, %v113
  %vm117 = vcmask 523264
  %118 = vst.msk [vmem:[%s4] sm:$0xff] %vm117, %v94
  %119 = vst.msk [vmem:[%s4 + $0x8] sm:$0xff] %vm117, %v116
  %s120 = scalar_lea.vmem %s1, 16
  %v121 = vld [vmem:[%s120] sm:$0xff]
  %v122 = vld [vmem:[%s120 + $0x8] sm:$0xf]
  %v124 = vsel %vm42, %v122, 0
  %126 = vmatpush.msra.mxu0 0.0
  %127 = vmatpush.msra.mxu0 0.0
  %128 = vmatpush.msra.mxu0 0.0
  %129 = vmatpush.msra.mxu0 0.0
  %130 = vmatpush.msra.mxu0 0.0
  %131 = vmatpush.msra.mxu0 0.0
  %132 = vmatpush.msra.mxu0 0.0
  %133 = vmatpush.msra.mxu0 0.0
  %134 = vmatpush.msra.mxu0 0.0
  %135 = vmatpush.msra.mxu0 0.0
  %136 = vmatpush.msra.mxu0 0.0
  %137 = vmatpush.msra.mxu0 0.0
  %138 = vmatpush.msra.mxu0 0.0
  %139 = vmatpush.msra.mxu0 0.0
  %140 = vmatpush.msra.mxu0 %v124
  %141 = vmatpush.msra.mxu0 %v121
  %142 = vmatmul.f32.gmra.mxu0 %v37
  %v143 = vpop.f32.mrf.mxu0
  %v144 = vadd.f32 %v28, %v143
  %145 = vmatmul.f32.gmra.mxu0 %v40
  %v146 = vpop.f32.mrf.mxu0
  %v147 = vadd.f32 %v33, %v146
  %148 = vdwg.mxu0
  %vm149 = vcmp.ge.f32.partialorder %v144, 0.0
  %vm150 = vcmp.ge.f32.partialorder %v147, 0.0
  %v151 = vmul.f32 %v71, %v144
  %v152 = vmul.f32 %v71, %v147
  %v153 = vsel %vm149, %v144, %v151
  %v154 = vsel %vm150, %v147, %v152
  %v155 = vmul.f32 %v153, %v78
  %v156 = vmul.f32 %v154, %v82
  %v157 = vadd.f32 %v155, %v88
  %v158 = vadd.f32 %v156, %v92
  %v160 = vrot.slane %v121, 3
  %v162 = vmax.f32 %v121, %v160
  %v163 = vrot.slane %v122, 3
  %v165 = vmax.f32 %v121, %v163
  %v166 = vmax.f32 %v122, %v163
  %v169 = vrot.slane %v165, 6
  %v170 = vrot.slane %v166, 6
  %v171 = vsel %vm106, %v169, %v170
  %v173 = vmax.f32 %v162, %v171
  %v175 = vrot.slane %v173, 3
  %v177 = vsel %vm115, %v158, %v175
  %s178 = scalar_lea.vmem %s4, 16
  %179 = vst.msk [vmem:[%s178] sm:$0xff] %vm117, %v157
  %180 = vst.msk [vmem:[%s178 + $0x8] sm:$0xff] %vm117, %v177
  // Predicated region
  $region18: #{_forward_patches.3} parent=0 // pred_check
    _
  $region19: #{_forward_patches.3} parent=0 // pred_check_branch
    %182 = sbr.rel (0) target = $region21
  $region20: #{_forward_patches.3} parent=0 // pred_region
    _
  $region21: #{_forward_patches.3} parent=0 // pred_fallthru
    _
  // Predicated region
  $region22: #{_forward_patches.3} parent=0 // pred_check
    _
  $region23: #{_forward_patches.3} parent=0 // pred_check_branch
    %184 = sbr.rel (0) target = $region25
  $region24: #{_forward_patches.3} parent=0 // pred_region
    _
  $region25: #{_forward_patches.3} parent=0 // pred_fallthru
    _

// kernel: _forward_patches.2
$region0: #{_forward_patches.2}
  #allocation0 [shape = 'u32[]', space=smem, size = 0x4, offset = 0x4, fixed_abs, tag = 'smem constant byte address 0x4 - core index']
  #allocation1 [shape = 'u32[72,128]{1,0:T(1,128)}', space=vmem, size = 0x9000, scoped, tag = 'internal scratch']
  #allocation2 [shape = 'f32[13,1]{1,0:T(8,128)}', space=vmem, size = 0x2000, scoped, tag = 'scratch operand']
  #allocation3 [shape = 'f32[13,1]{1,0:T(8,128)}', space=vmem, size = 0x2000, scoped, tag = 'scratch operand']
  #allocation4 [shape = 'f32[1]{0:T(128)S(6)}', space=smem, size = 0x200, scoped, tag = 'scoped memory for _forward_patches.2']
  %s0 = inlined_call_operand.<no memory space> [shape: f32[1], index: 0, kind: input, shape index: {}]
  %s1 = inlined_call_operand.vmem [shape: f32[2,12,64], index: 1, kind: input, shape index: {}]
  %s2 = inlined_call_operand.vmem [shape: f32[13,12], index: 2, kind: input, shape index: {}]
  %s3 = inlined_call_operand.vmem [shape: f32[13,1], index: 3, kind: input, shape index: {}]
  %s4 = inlined_call_operand.vmem [shape: f32[1,13,2], index: 4, kind: output, shape index: {}]
  %s5 = sld [smem:[#allocation0]]
  $region34: #{_forward_patches.2} parent=0
    _
  %s7 = ssub.s32 1, %s5
  %s8 = scalar_select 0, %s7, %s5
  %9 = sst [smem:[#allocation4]] %s0
  // Predicated region
  $region2: #{_forward_patches.2} parent=0 // pred_check
    _
  $region3: #{_forward_patches.2} parent=0 // pred_check_branch
    %11 = sbr.rel (0) target = $region5
  $region4: #{_forward_patches.2} parent=0 // pred_region
    _
  $region5: #{_forward_patches.2} parent=0 // pred_fallthru
    _
  // Predicated region
  $region6: #{_forward_patches.2} parent=0 // pred_check
    _
  $region7: #{_forward_patches.2} parent=0 // pred_check_branch
    %13 = sbr.rel (0) target = $region9
  $region8: #{_forward_patches.2} parent=0 // pred_region
    _
  $region9: #{_forward_patches.2} parent=0 // pred_fallthru
    _
  // Predicated region
  $region10: #{_forward_patches.2} parent=0 // pred_check
    _
  $region11: #{_forward_patches.2} parent=0 // pred_check_branch
    %15 = sbr.rel (0) target = $region13
  $region12: #{_forward_patches.2} parent=0 // pred_region
    _
  $region13: #{_forward_patches.2} parent=0 // pred_fallthru
    _
  // Predicated region
  $region14: #{_forward_patches.2} parent=0 // pred_check
    _
  $region15: #{_forward_patches.2} parent=0 // pred_check_branch
    %17 = sbr.rel (0) target = $region17
  $region16: #{_forward_patches.2} parent=0 // pred_region
    _
  $region17: #{_forward_patches.2} parent=0 // pred_fallthru
    _
  %p18 = scmp.eq.s32.totalorder 0, 0
  // Predicated region
  $region18: #{_forward_patches.2} parent=0 // pred_check
    %p19 = pneg %p18
  $region19: #{_forward_patches.2} parent=0 // pred_check_branch
    %21 = sbr.rel (%p19) target = $region21
  $region20: #{_forward_patches.2} parent=0 // pred_region
    %vm22 = vcmask 7168
    %23 = vst.msk [vmem:[#allocation2] sm:$0xff] %vm22, 0.0
    %vm24 = vcmask 4096
    %25 = vst.msk [vmem:[#allocation2 + $0x8] sm:$0x1f] %vm24, 0.0
    %26 = vst.msk [vmem:[#allocation3] sm:$0xff] %vm22, 0.0
    %27 = vst.msk [vmem:[#allocation3 + $0x8] sm:$0x1f] %vm24, 0.0
  $region21: #{_forward_patches.2} parent=0 // pred_fallthru
    _
  %s28 = smul.u32 0, 64
  %v29 = vlaneseq
  %v30 = vand.u32 %v29, 127
  %v31 = vstv %s28
  %v32 = vadd.s32 %v31, %v30
  %vm33 = vcmp.lt.s32.totalorder %v32, 64
  %s34 = ssub.s32 64, %s28
  %p35 = scmp.lt.s32.totalorder %s34, 64
  %s36 = scalar_select %p35, %s34, 64
  %s37 = scvt.s32.f32 %s36
  %s38 = sld [smem:[#allocation4]]
  %v39 = vld [vmem:[%s2] sm:$0xff]
  %v40 = vld [vmem:[%s2 + $0x8] sm:$0x1f]
  %v41 = vld [vmem:[%s3] sm:$0xff]
  %v42 = vld [vmem:[%s3 + $0x8] sm:$0x1f]
  %v43 = vld [vmem:[%s1] sm:$0xff]
  %v44 = vld [vmem:[%s1 + $0x8] sm:$0xf]
  %46 = vset.pattern.permute.xlu0 0
  %47 = vperm.xlu0 %46, %v41
  %v48 = vpop.permute.xlu0 %47
  %51 = vset.pattern.permute.xlu0 0
  %52 = vperm.xlu0 %51, %v42
  %v53 = vpop.permute.xlu0 %52
  %vm55 = vcmask 97280
  %v57 = vsel %vm55, %v39, 0
  %v60 = vsel %vm55, %v40, 0
  %vm62 = vcmask 1043456
  %v64 = vsel %vm62, %v44, 0
  %66 = vmatpush.msra.mxu0 0.0
  %67 = vmatpush.msra.mxu0 0.0
  %68 = vmatpush.msra.mxu0 0.0
  %69 = vmatpush.msra.mxu0 0.0
  %70 = vmatpush.msra.mxu0 0.0
  %71 = vmatpush.msra.mxu0 0.0
  %72 = vmatpush.msra.mxu0 0.0
  %73 = vmatpush.msra.mxu0 0.0
  %74 = vmatpush.msra.mxu0 0.0
  %75 = vmatpush.msra.mxu0 0.0
  %76 = vmatpush.msra.mxu0 0.0
  %77 = vmatpush.msra.mxu0 0.0
  %78 = vmatpush.msra.mxu0 0.0
  %79 = vmatpush.msra.mxu0 0.0
  %80 = vmatpush.msra.mxu0 %v64
  %81 = vmatpush.msra.mxu0 %v43
  %82 = vmatmul.f32.gmra.mxu0 %v57
  %v83 = vpop.f32.mrf.mxu0
  %v84 = vadd.f32 %v48, %v83
  %85 = vmatmul.f32.gmra.mxu0 %v60
  %v86 = vpop.f32.mrf.mxu0
  %v87 = vadd.f32 %v53, %v86
  %88 = vdwg.mxu0
  %vm89 = vcmp.ge.f32.partialorder %v84, 0.0
  %vm90 = vcmp.ge.f32.partialorder %v87, 0.0
  %v91 = vstv %s38
  %v92 = vmul.f32 %v91, %v84
  %v93 = vmul.f32 %v91, %v87
  %v94 = vsel %vm89, %v84, %v92
  %v95 = vsel %vm90, %v87, %v93
  %v96 = vsel %vm33, 1, 0
  %vm97 = vcmp.eq.s32.totalorder %v96, 1
  %v98 = vsel %vm97, %v94, 0.0
  %v99 = vsel %vm97, %v95, 0.0
  %vm100 = vcmask 523264
  %v101 = vsel %vm100, %v98, 0.0
  %102 = vadd.xlane.f32.xlu0 %v101
  %v103 = vpop.xlane.xlu0 %102
  %vm104 = vcmask 520192
  %v105 = vsel %vm104, %v99, 0.0
  %106 = vadd.xlane.f32.xlu0 %v105
  %v107 = vpop.xlane.xlu0 %106
  %v108 = vstv %s37
  %v109 = vrcp.pop %v108
  %v110 = vmul.f32 %v108, %v109
  %v111 = vsub.f32 1.0, %v110
  %v112 = vmul.f32 %v109, %v111
  %v113 = vadd.f32 %v109, %v112
  %vm114 = vweird.f32 %v108
  %vm115 = vweird.f32 %v109
  %vm116 = vmor %vm114, %vm115
  %v117 = vsel %vm116, %v109, %v113
  %v118 = vand.u32 2147483647, %v108
  %vm119 = vcmp.eq.f32.partialorder %v118, 8.507059e+37
  %v120 = vand.u32 %v108, 2147483648
  %v121 = vor.u32 1.1754944e-38, %v120
  %v122 = vsel %vm119, %v121, %v117
  %v123 = vmul.f32 %v103, %v122
  %v124 = vmul.f32 %v107, %v122
  %v125 = vsub.f32 %v94, %v123
  %v126 = vsub.f32 %v95, %v124
  %v127 = vsel %vm97, %v125, 0.0
  %v128 = vsel %vm97, %v126, 0.0
  %v129 = vmul.f32 %v127, %v127
  %v130 = vmul.f32 %v128, %v128
  %v131 = vsel %vm100, %v129, 0.0
  %132 = vadd.xlane.f32.xlu0 %v131
  %v133 = vpop.xlane.xlu0 %132
  %v134 = vsel %vm104, %v130, 0.0
  %135 = vadd.xlane.f32.xlu0 %v134
  %v136 = vpop.xlane.xlu0 %135
  %s137 = scvt.s32.f32 0
  %s138 = smul.f32 %s137, 128.0
  %s139 = smul.f32 %s37, 0.0
  %s140 = sadd.f32 %s138, %s139
  %s141 = sadd.f32 %s140, %s37
  %v142 = vld [vmem:[#allocation2] sm:$0xff]
  %v143 = vld [vmem:[#allocation2 + $0x8] sm:$0x1f]
  %v144 = vsub.f32 %v123, %v142
  %v145 = vsub.f32 %v124, %v143
  %v146 = vstv %s141
  %v147 = vrcp.pop %v146
  %v148 = vmul.f32 %v146, %v147
  %v149 = vsub.f32 1.0, %v148
  %v150 = vmul.f32 %v147, %v149
  %v151 = vadd.f32 %v147, %v150
  %vm152 = vweird.f32 %v146
  %vm153 = vweird.f32 %v147
  %vm154 = vmor %vm152, %vm153
  %v155 = vsel %vm154, %v147, %v151
  %v156 = vand.u32 2147483647, %v146
  %vm157 = vcmp.eq.f32.partialorder %v156, 8.507059e+37
  %v158 = vand.u32 %v146, 2147483648
  %v159 = vor.u32 1.1754944e-38, %v158
  %v160 = vsel %vm157, %v159, %v155
  %s161 = vtos %v160
  %s162 = smul.f32 %s37, %s161
  %v163 = vstv %s162
  %v164 = vmul.f32 %v144, %v163
  %v165 = vmul.f32 %v145, %v163
  %v166 = vadd.f32 %v142, %v164
  %v167 = vadd.f32 %v143, %v165
  %vm168 = vcmask 7168
  %169 = vst.msk [vmem:[#allocation2] sm:$0xff] %vm168, %v166
  %vm170 = vcmask 4096
  %171 = vst.msk [vmem:[#allocation2 + $0x8] sm:$0x1f] %vm170, %v167
  %v172 = vld [vmem:[#allocation3] sm:$0xff]
  %v173 = vld [vmem:[#allocation3 + $0x8] sm:$0x1f]
  %v174 = vadd.f32 %v172, %v133
  %v175 = vadd.f32 %v173, %v136
  %v176 = vmul.f32 %v144, %v144
  %v177 = vmul.f32 %v145, %v145
  %s178 = smul.f32 %s140, %s37
  %v179 = vstv %s141
  %v180 = vrcp.pop %v179
  %v181 = vmul.f32 %v179, %v180
  %v182 = vsub.f32 1.0, %v181
  %v183 = vmul.f32 %v180, %v182
  %v184 = vadd.f32 %v180, %v183
  %vm185 = vweird.f32 %v179
  %vm186 = vweird.f32 %v180
  %vm187 = vmor %vm185, %vm186
  %v188 = vsel %vm187, %v180, %v184
  %v189 = vand.u32 2147483647, %v179
  %vm190 = vcmp.eq.f32.partialorder %v189, 8.507059e+37
  %v191 = vand.u32 %v179, 2147483648
  %v192 = vor.u32 1.1754944e-38, %v191
  %v193 = vsel %vm190, %v192, %v188
  %s194 = vtos %v193
  %s195 = smul.f32 %s178, %s194
  %v196 = vstv %s195
  %v197 = vmul.f32 %v176, %v196
  %v198 = vmul.f32 %v177, %v196
  %v199 = vadd.f32 %v174, %v197
  %v200 = vadd.f32 %v175, %v198
  %201 = vst.msk [vmem:[#allocation3] sm:$0xff] %vm168, %v199
  %202 = vst.msk [vmem:[#allocation3 + $0x8] sm:$0x1f] %vm170, %v200
  %s203 = scalar_lea.vmem %s1, 16
  %v204 = vld [vmem:[%s203] sm:$0xff]
  %v205 = vld [vmem:[%s203 + $0x8] sm:$0xf]
  %v207 = vsel %vm62, %v205, 0
  %209 = vmatpush.msra.mxu0 0.0
  %210 = vmatpush.msra.mxu0 0.0
  %211 = vmatpush.msra.mxu0 0.0
  %212 = vmatpush.msra.mxu0 0.0
  %213 = vmatpush.msra.mxu0 0.0
  %214 = vmatpush.msra.mxu0 0.0
  %215 = vmatpush.msra.mxu0 0.0
  %216 = vmatpush.msra.mxu0 0.0
  %217 = vmatpush.msra.mxu0 0.0
  %218 = vmatpush.msra.mxu0 0.0
  %219 = vmatpush.msra.mxu0 0.0
  %220 = vmatpush.msra.mxu0 0.0
  %221 = vmatpush.msra.mxu0 0.0
  %222 = vmatpush.msra.mxu0 0.0
  %223 = vmatpush.msra.mxu0 %v207
  %224 = vmatpush.msra.mxu0 %v204
  %225 = vmatmul.f32.gmra.mxu0 %v57
  %v226 = vpop.f32.mrf.mxu0
  %v227 = vadd.f32 %v48, %v226
  %228 = vmatmul.f32.gmra.mxu0 %v60
  %v229 = vpop.f32.mrf.mxu0
  %v230 = vadd.f32 %v53, %v229
  %231 = vdwg.mxu0
  %vm232 = vcmp.ge.f32.partialorder %v227, 0.0
  %vm233 = vcmp.ge.f32.partialorder %v230, 0.0
  %v234 = vmul.f32 %v91, %v227
  %v235 = vmul.f32 %v91, %v230
  %v236 = vsel %vm232, %v227, %v234
  %v237 = vsel %vm233, %v230, %v235
  %v238 = vsel %vm97, %v236, 0.0
  %v239 = vsel %vm97, %v237, 0.0
  %v240 = vsel %vm100, %v238, 0.0
  %241 = vadd.xlane.f32.xlu0 %v240
  %v242 = vpop.xlane.xlu0 %241
  %v243 = vsel %vm104, %v239, 0.0
  %244 = vadd.xlane.f32.xlu0 %v243
  %v245 = vpop.xlane.xlu0 %244
  %v246 = vmul.f32 %v242, %v122
  %v247 = vmul.f32 %v245, %v122
  %v248 = vsub.f32 %v236, %v246
  %v249 = vsub.f32 %v237, %v247
  %v250 = vsel %vm97, %v248, 0.0
  %v251 = vsel %vm97, %v249, 0.0
  %v252 = vmul.f32 %v250, %v250
  %v253 = vmul.f32 %v251, %v251
  %v254 = vsel %vm100, %v252, 0.0
  %255 = vadd.xlane.f32.xlu0 %v254
  %v256 = vpop.xlane.xlu0 %255
  %v257 = vsel %vm104, %v253, 0.0
  %258 = vadd.xlane.f32.xlu0 %v257
  %v259 = vpop.xlane.xlu0 %258
  %s260 = sadd.f32 %s138, %s37
  %s261 = sadd.f32 %s260, %s37
  %v262 = vld [vmem:[#allocation2] sm:$0xff]
  %v263 = vld [vmem:[#allocation2 + $0x8] sm:$0x1f]
  %v264 = vsub.f32 %v246, %v262
  %v265 = vsub.f32 %v247, %v263
  %v266 = vstv %s261
  %v267 = vrcp.pop %v266
  %v268 = vmul.f32 %v266, %v267
  %v269 = vsub.f32 1.0, %v268
  %v270 = vmul.f32 %v267, %v269
  %v271 = vadd.f32 %v267, %v270
  %vm272 = vweird.f32 %v266
  %vm273 = vweird.f32 %v267
  %vm274 = vmor %vm272, %vm273
  %v275 = vsel %vm274, %v267, %v271
  %v276 = vand.u32 2147483647, %v266
  %vm277 = vcmp.eq.f32.partialorder %v276, 8.507059e+37
  %v278 = vand.u32 %v266, 2147483648
  %v279 = vor.u32 1.1754944e-38, %v278
  %v280 = vsel %vm277, %v279, %v275
  %s281 = vtos %v280
  %s282 = smul.f32 %s37, %s281
  %v283 = vstv %s282
  %v284 = vmul.f32 %v264, %v283
  %v285 = vmul.f32 %v265, %v283
  %v286 = vadd.f32 %v262, %v284
  %v287 = vadd.f32 %v263, %v285
  %288 = vst.msk [vmem:[#allocation2] sm:$0xff] %vm168, %v286
  %289 = vst.msk [vmem:[#allocation2 + $0x8] sm:$0x1f] %vm170, %v287
  %v290 = vld [vmem:[#allocation3] sm:$0xff]
  %v291 = vld [vmem:[#allocation3 + $0x8] sm:$0x1f]
  %v292 = vadd.f32 %v290, %v256
  %v293 = vadd.f32 %v291, %v259
  %v294 = vmul.f32 %v264, %v264
  %v295 = vmul.f32 %v265, %v265
  %s296 = smul.f32 %s260, %s37
  %v297 = vstv %s261
  %v298 = vrcp.pop %v297
  %v299 = vmul.f32 %v297, %v298
  %v300 = vsub.f32 1.0, %v299
  %v301 = vmul.f32 %v298, %v300
  %v302 = vadd.f32 %v298, %v301
  %vm303 = vweird.f32 %v297
  %vm304 = vweird.f32 %v298
  %vm305 = vmor %vm303, %vm304
  %v306 = vsel %vm305, %v298, %v302
  %v307 = vand.u32 2147483647, %v297
  %vm308 = vcmp.eq.f32.partialorder %v307, 8.507059e+37
  %v309 = vand.u32 %v297, 2147483648
  %v310 = vor.u32 1.1754944e-38, %v309
  %v311 = vsel %vm308, %v310, %v306
  %s312 = vtos %v311
  %s313 = smul.f32 %s296, %s312
  %v314 = vstv %s313
  %v315 = vmul.f32 %v294, %v314
  %v316 = vmul.f32 %v295, %v314
  %v317 = vadd.f32 %v292, %v315
  %v318 = vadd.f32 %v293, %v316
  %319 = vst.msk [vmem:[#allocation3] sm:$0xff] %vm168, %v317
  %320 = vst.msk [vmem:[#allocation3 + $0x8] sm:$0x1f] %vm170, %v318
  // Predicated region
  $region22: #{_forward_patches.2} parent=0 // pred_check
    %p321 = pneg %p18
  $region23: #{_forward_patches.2} parent=0 // pred_check_branch
    %323 = sbr.rel (%p321) target = $region25
  $region24: #{_forward_patches.2} parent=0 // pred_region
    %v324 = vld [vmem:[#allocation2] sm:$0xff]
    %v325 = vld [vmem:[#allocation2 + $0x8] sm:$0x1f]
    %v326 = vld [vmem:[#allocation3] sm:$0xff]
    %v327 = vld [vmem:[#allocation3 + $0x8] sm:$0x1f]
    %330 = vrot.lane.b32.xlu0 %v326, 1
    %v331 = vpop.permute.xlu0 %330
    %332 = vrot.lane.b32.xlu0 %v327, 1
    %v333 = vpop.permute.xlu0 %332
    %v336 = vsel %vm168, %v324, %v331
    %v337 = vsel %vm168, %v325, %v333
    %vm338 = vcmask 15360
    %339 = vst.msk [vmem:[%s4] sm:$0xff] %vm338, %v336
    %vm340 = vcmask 12288
    %341 = vst.msk [vmem:[%s4 + $0x8] sm:$0x1f] %vm340, %v337
  $region25: #{_forward_patches.2} parent=0 // pred_fallthru
    _
  // Predicated region
  $region26: #{_forward_patches.2} parent=0 // pred_check
    _
  $region27: #{_forward_patches.2} parent=0 // pred_check_branch
    %343 = sbr.rel (0) target = $region29
  $region28: #{_forward_patches.2} parent=0 // pred_region
    _
  $region29: #{_forward_patches.2} parent=0 // pred_fallthru
    _
  // Predicated region
  $region30: #{_forward_patches.2} parent=0 // pred_check
    _
  $region31: #{_forward_patches.2} parent=0 // pred_check_branch
    %345 = sbr.rel (0) target = $region33
  $region32: #{_forward_patches.2} parent=0 // pred_region
    _
  $region33: #{_forward_patches.2} parent=0 // pred_fallthru
    _

</llo_original>
